<compile_context>
chip_gen: v7x
topology: tpu7x:2x2x1
jax: 0.10.0
libtpu: 0.0.40
codegen_flags: <defaults>
</compile_context>

<pallas_src>
import functools

import jax
import jax.numpy as jnp
from jax.experimental import pallas as pl
from jax.experimental.pallas import tpu as pltpu

FOLD = 8  # original node rows folded into one lane-dense kernel row


def _round_up(x: int, m: int) -> int:
    return ((x + m - 1) // m) * m


# ----------------------------------------------------------------------------
# Pallas kernel: fused MLP on fold-8 lane-dense rows.
#   x_f  : (tile_g, FOLD*in)   f32
#   w01  : (FOLD*in, FOLD*f1)  bf16  block-diag of fused W0@W1
#   b01  : (1, FOLD*f1)        f32   tiled fused bias
#   w2   : (FOLD*f1, FOLD*out) bf16  block-diag of W2
#   b2   : (1, FOLD*out)       f32   tiled bias
#   o    : (tile_g, FOLD*out)  f32   (FOLD*out = 128 -> fully lane-dense store)
# ----------------------------------------------------------------------------
def mlp_kernel(x_ref, w01_ref, b01_ref, w2_ref, b2_ref, o_ref):
    # Cast x to bf16 here (free VPU op) instead of a standalone HBM cast pass.
    xb = x_ref[...].astype(jnp.bfloat16)
    # Fused Linear0.Linear1 (exact: no activation between them) as one MXU pass.
    h = jnp.dot(xb, w01_ref[...], preferred_element_type=jnp.float32)
    h = jnp.maximum(h + b01_ref[...], 0.0)          # bias + ReLU in f32
    # Final Linear.
    out = jnp.dot(h.astype(jnp.bfloat16), w2_ref[...],
                  preferred_element_type=jnp.float32)
    o_ref[...] = (out + b2_ref[...]).astype(o_ref.dtype)


def prepare_params(params):
    """One-time weight prep (hoisted out of the forward path).

    params: [(W0, b0), (W1, b1), (W2, b2)] with W: (in, out), b: (1, out).
    Returns lane-dense, fold-8 block-diagonal operands for the kernel.
    """
    (w0, b0), (w1, b1), (w2, b2) = params
    hi = jax.lax.Precision.HIGHEST
    # Exact f32 fusion of the two adjacent Linears (no activation in between).
    w01 = jnp.dot(w0, w1, precision=hi)                    # (in, f1)
    b01 = jnp.dot(b0, w1, precision=hi) + b1               # (1, f1)
    eye = jnp.eye(FOLD, dtype=jnp.float32)
    w01_bd = jnp.kron(eye, w01)                            # (FOLD*in, FOLD*f1)
    w2_bd = jnp.kron(eye, w2)                              # (FOLD*f1, FOLD*out)
    b01_t = jnp.tile(b01, (1, FOLD)).astype(jnp.float32)   # (1, FOLD*f1)
    b2_t = jnp.tile(b2, (1, FOLD)).astype(jnp.float32)     # (1, FOLD*out)
    return (w01_bd.astype(jnp.bfloat16), b01_t,
            w2_bd.astype(jnp.bfloat16), b2_t)


def _pick_tile_g(R: int, requested_rows: int) -> int:
    """Folded-row tile: multiple of 8 sublanes, >=2 grid steps on large inputs."""
    req_g = max(1, requested_rows // FOLD)
    if R <= 8:
        return R                       # single block equal to the full dim
    t = max(8, (min(req_g, R) // 8) * 8)
    if t >= R:                         # keep both v7x TCs fed when R is large
        t = max(8, _round_up(pl.cdiv(R, 2), 8))
    return t


@functools.partial(jax.jit, static_argnames=("tile_rows",))
def mlp_forward(x, prepared, *, tile_rows=32768):
    """x: (N, inputsize) f32; prepared: output of prepare_params()."""
    w01_bd, b01_t, w2_bd, b2_t = prepared
    n, in_dim = x.shape
    out_dim = b2_t.shape[1] // FOLD

    # Pad rows only to the fold multiple (<=7 rows), never to the tile size.
    n8 = _round_up(max(n, 1), FOLD)
    xp = x if n8 == n else jnp.pad(x, ((0, n8 - n), (0, 0)))
    R = n8 // FOLD
    x_f = xp.reshape(R, FOLD * in_dim)          # free contiguous view under jit

    tile_g = _pick_tile_g(R, tile_rows)
    grid = (pl.cdiv(R, tile_g),)                # last block may be ragged

    row_map = lambda i: (i, 0)                  # tiled over folded rows
    const_map = lambda i: (0, 0)                # weights stay VMEM-resident

    flops = 2 * R * (w01_bd.shape[0] * w01_bd.shape[1]
                     + w2_bd.shape[0] * w2_bd.shape[1])
    bytes_accessed = (int(x_f.size) * 4 + R * FOLD * out_dim * 4
                      + sum(int(a.size) * a.dtype.itemsize
                            for a in (w01_bd, b01_t, w2_bd, b2_t)))

    out_f = pl.pallas_call(
        mlp_kernel,
        out_shape=jax.ShapeDtypeStruct((R, FOLD * out_dim), jnp.float32),
        grid_spec=pltpu.PrefetchScalarGridSpec(
            num_scalar_prefetch=0,
            grid=grid,
            in_specs=[
                pl.BlockSpec((tile_g, FOLD * in_dim), row_map),
                pl.BlockSpec(w01_bd.shape, const_map),
                pl.BlockSpec(b01_t.shape, const_map),
                pl.BlockSpec(w2_bd.shape, const_map),
                pl.BlockSpec(b2_t.shape, const_map),
            ],
            out_specs=pl.BlockSpec((tile_g, FOLD * out_dim), row_map),
        ),
        compiler_params=pltpu.CompilerParams(
            dimension_semantics=("parallel",),      # shard row tiles over v7x's 2 TCs
            vmem_limit_bytes=48 * 1024 * 1024,      # headroom for 32K-128K row tiles
        ),
        cost_estimate=pl.CostEstimate(
            flops=flops, transcendentals=0, bytes_accessed=bytes_accessed),
    )(x_f, w01_bd, b01_t, w2_bd, b2_t)

    out = out_f.reshape(R * FOLD, out_dim)      # free contiguous view
    return out if n == R * FOLD else out[:n]


def init_params(key, inputsize, features, outputsize):
    """Deterministic parameter init; mirrors the layer shapes of build_layers."""
    dims = [inputsize] + list(features) + [outputsize]
    params = []
    for i in range(len(dims) - 1):
        key, kw, kb = jax.random.split(key, 3)
        fan_in, fan_out = dims[i], dims[i + 1]
        bound = 1.0 / jnp.sqrt(fan_in)
        w = jax.random.uniform(kw, (fan_in, fan_out), jnp.float32, -bound, bound)
        b = jax.random.uniform(kb, (1, fan_out), jnp.float32, -bound, bound)
        params.append((w, b))
    return params


def ref_forward(x, params):
    """Plain-JAX f32 reference mirroring the PyTorch MLP exactly."""
    hi = jax.lax.Precision.HIGHEST
    (w0, b0), (w1, b1), (w2, b2) = params
    h = jnp.dot(x, w0, precision=hi) + b0
    h = jnp.dot(h, w1, precision=hi) + b1
    h = jnp.maximum(h, 0.0)
    return jnp.dot(h, w2, precision=hi) + b2


if __name__ == "__main__":
    config = {
        "inputs": ["feat_a", "feat_b"],
        "output": "pred",
        "inputsize": 8,          # 4 + 4 from the two concatenated ndata inputs
        "outputsize": 16,
        "layers": [32, 32],      # Linear(8,32), Linear(32,32), ReLU, Linear(32,16)
    }

    key = jax.random.PRNGKey(0)
    key, ka, kb = jax.random.split(key, 3)

    n_nodes = 8
    ndata = {
        "feat_a": jax.random.normal(ka, (n_nodes, 4), jnp.float32),
        "feat_b": jax.random.normal(kb, (n_nodes, 4), jnp.float32),
    }

    # Forward: concat node features along dim=1 (plain-JAX glue, mimics torch.cat
    # over g.ndata), then the fused fold-8 MLP kernel.
    node_data = jnp.concatenate([ndata[name] for name in config["inputs"]], axis=1)
    params = init_params(key, config["inputsize"], config["layers"], config["outputsize"])
    prepared = prepare_params(params)      # hoisted: done once, not per forward

    out = mlp_forward(node_data, prepared)
    out = jax.block_until_ready(out)
    ndata[config["output"]] = out          # mimic g.ndata[config['output']] = ...

    ref = ref_forward(node_data, params)
    assert out.shape == (n_nodes, config["outputsize"])
    assert jnp.allclose(out, ref, atol=2e-2, rtol=2e-2), float(jnp.max(jnp.abs(out - ref)))

    # Ragged-N path (N not a multiple of the 8-row fold).
    key, kx = jax.random.split(key)
    x_tail = jax.random.normal(kx, (13, config["inputsize"]), jnp.float32)
    out_tail = jax.block_until_ready(mlp_forward(x_tail, prepared))
    ref_tail = ref_forward(x_tail, params)
    assert out_tail.shape == (13, config["outputsize"])
    assert jnp.allclose(out_tail, ref_tail, atol=2e-2, rtol=2e-2)

    # Multi-block grid with a ragged trailing block (exercises tiling path).
    key, kx2 = jax.random.split(key)
    x_big = jax.random.normal(kx2, (200, config["inputsize"]), jnp.float32)
    out_big = jax.block_until_ready(mlp_forward(x_big, prepared, tile_rows=192))
    ref_big = ref_forward(x_big, params)
    assert out_big.shape == (200, config["outputsize"])
    assert jnp.allclose(out_big, ref_big, atol=2e-2, rtol=2e-2)

    print("KERNEL_OK")
</pallas_src>

<mosaic_0001>
module attributes {stable_mosaic.version = 11 : i64} {
  func.func @mlp_kernel(%arg0: i32, %arg1: memref<1x64xf32, #tpu.memory_space<vmem>>, %arg2: memref<64x256xbf16, #tpu.memory_space<vmem>>, %arg3: memref<1x256xf32, #tpu.memory_space<vmem>>, %arg4: memref<256x128xbf16, #tpu.memory_space<vmem>>, %arg5: memref<1x128xf32, #tpu.memory_space<vmem>>, %arg6: memref<1x128xf32, #tpu.memory_space<vmem>>) attributes {dimension_semantics = [#tpu.dimension_semantics<parallel>], iteration_bounds = array<i64: 1>, scalar_prefetch = 0 : i64, scratch_operands = 0 : i64, tpu.core_type = #tpu.core_type<tc>, window_params = [{transform_indices = @transform_0, window_bounds = array<i64: 1, 64>}, {pipeline_mode = #tpu.pipeline_mode<synchronous>, transform_indices = @transform_1, window_bounds = array<i64: 64, 256>}, {pipeline_mode = #tpu.pipeline_mode<synchronous>, transform_indices = @transform_2, window_bounds = array<i64: 1, 256>}, {pipeline_mode = #tpu.pipeline_mode<synchronous>, transform_indices = @transform_3, window_bounds = array<i64: 256, 128>}, {pipeline_mode = #tpu.pipeline_mode<synchronous>, transform_indices = @transform_4, window_bounds = array<i64: 1, 128>}, {transform_indices = @transform_5, window_bounds = array<i64: 1, 128>}]} {
    %c0 = arith.constant 0 : index
    %c0_0 = arith.constant 0 : index
    %0 = vector.load %arg1[%c0, %c0_0] : memref<1x64xf32, #tpu.memory_space<vmem>>, vector<1x64xf32>
    %1 = arith.truncf %0 : vector<1x64xf32> to vector<1x64xbf16>
    %c0_1 = arith.constant 0 : index
    %c0_2 = arith.constant 0 : index
    %2 = vector.load %arg2[%c0_1, %c0_2] : memref<64x256xbf16, #tpu.memory_space<vmem>>, vector<64x256xbf16>
    %cst = arith.constant dense<0.000000e+00> : vector<1x256xf32>
    %3 = tpu.matmul %1, %2, %cst {dimension_numbers = #tpu.dot_dimension_numbers<[1], [0], [0], [1], [0, 0, 1, 1], [], []>} : vector<1x64xbf16>, vector<64x256xbf16>, vector<1x256xf32> -> vector<1x256xf32>
    %c0_3 = arith.constant 0 : index
    %c0_4 = arith.constant 0 : index
    %4 = vector.load %arg3[%c0_3, %c0_4] : memref<1x256xf32, #tpu.memory_space<vmem>>, vector<1x256xf32>
    %5 = arith.addf %3, %4 : vector<1x256xf32>
    %cst_5 = arith.constant 0.000000e+00 : f32
    %6 = vector.broadcast %cst_5 : f32 to vector<1x256xf32>
    %7 = arith.maximumf %5, %6 : vector<1x256xf32>
    %8 = arith.truncf %7 : vector<1x256xf32> to vector<1x256xbf16>
    %c0_6 = arith.constant 0 : index
    %c0_7 = arith.constant 0 : index
    %9 = vector.load %arg4[%c0_6, %c0_7] : memref<256x128xbf16, #tpu.memory_space<vmem>>, vector<256x128xbf16>
    %cst_8 = arith.constant dense<0.000000e+00> : vector<1x128xf32>
    %10 = tpu.matmul %8, %9, %cst_8 {dimension_numbers = #tpu.dot_dimension_numbers<[1], [0], [0], [1], [0, 0, 1, 1], [], []>} : vector<1x256xbf16>, vector<256x128xbf16>, vector<1x128xf32> -> vector<1x128xf32>
    %c0_9 = arith.constant 0 : index
    %c0_10 = arith.constant 0 : index
    %11 = vector.load %arg5[%c0_9, %c0_10] : memref<1x128xf32, #tpu.memory_space<vmem>>, vector<1x128xf32>
    %12 = arith.addf %10, %11 : vector<1x128xf32>
    %c0_11 = arith.constant 0 : index
    %c0_12 = arith.constant 0 : index
    %13 = vector.load %arg6[%c0_11, %c0_12] : memref<1x128xf32, #tpu.memory_space<vmem>>, vector<1x128xf32>
    tpu.vector_store %arg6[%c0_11, %c0_12], %12 {strides = array<i32>} : memref<1x128xf32, #tpu.memory_space<vmem>>, vector<1x128xf32>,
    return
  }
  func.func @transform_0(%arg0: i32) -> (i32, i32) {
    %c0_i32 = arith.constant 0 : i32
    %c0_i32_0 = arith.constant 0 : i32
    return %arg0, %c0_i32 : i32, i32
  }
  func.func @transform_1(%arg0: i32) -> (i32, i32) {
    %c0_i32 = arith.constant 0 : i32
    %c0_i32_0 = arith.constant 0 : i32
    %c0_i32_1 = arith.constant 0 : i32
    return %c0_i32, %c0_i32_0 : i32, i32
  }
  func.func @transform_2(%arg0: i32) -> (i32, i32) {
    %c0_i32 = arith.constant 0 : i32
    %c0_i32_0 = arith.constant 0 : i32
    %c0_i32_1 = arith.constant 0 : i32
    return %c0_i32, %c0_i32_0 : i32, i32
  }
  func.func @transform_3(%arg0: i32) -> (i32, i32) {
    %c0_i32 = arith.constant 0 : i32
    %c0_i32_0 = arith.constant 0 : i32
    %c0_i32_1 = arith.constant 0 : i32
    return %c0_i32, %c0_i32_0 : i32, i32
  }
  func.func @transform_4(%arg0: i32) -> (i32, i32) {
    %c0_i32 = arith.constant 0 : i32
    %c0_i32_0 = arith.constant 0 : i32
    %c0_i32_1 = arith.constant 0 : i32
    return %c0_i32, %c0_i32_0 : i32, i32
  }
  func.func @transform_5(%arg0: i32) -> (i32, i32) {
    %c0_i32 = arith.constant 0 : i32
    %c0_i32_0 = arith.constant 0 : i32
    return %arg0, %c0_i32 : i32, i32
  }
}

</mosaic_0001>

<llo_original>
// kernel: mlp_forward.1
$region0: #{mlp_forward.1}
  #allocation0 [shape = 'u32[]', space=smem, size = 0x4, offset = 0x4, fixed_abs, tag = 'smem constant byte address 0x4 - core index']
  #allocation1 [shape = 'u32[144,128]{1,0:T(1,128)}', space=vmem, size = 0x12000, scoped, tag = 'internal scratch']
  %s0 = inlined_call_operand.vmem [shape: f32[1,64], index: 0, kind: input, shape index: {}]
  %s1 = inlined_call_operand.hbm [shape: bf16[64,256], index: 1, kind: input, shape index: {}]
  %s2 = inlined_call_operand.vmem [shape: f32[1,256], index: 2, kind: input, shape index: {}]
  %s3 = inlined_call_operand.hbm [shape: bf16[256,128], index: 3, kind: input, shape index: {}]
  %s4 = inlined_call_operand.vmem [shape: f32[1,128], index: 4, kind: input, shape index: {}]
  %s5 = inlined_call_operand.vmem [shape: f32[1,128], index: 5, kind: output, shape index: {}]
  %s6 = sld [smem:[#allocation0]]
  $region38: #{mlp_forward.1} parent=0
    _
  %s8 = ssub.s32 1, %s6
  %s9 = scalar_select 0, %s8, %s6
  $region1: #{mlp_forward.1} parent=0
    #allocation2 [shape = 'u8[32768]{0}', space=vmem, size = 0x8000, scoped, tag = 'input window, operand 1, single buffered']
    #allocation3 [shape = 's32[1]{0}', space=sflag, size = 0x4, scoped, tag = 'scoped memory for mlp_forward.1']
    #allocation4 [shape = 'u8[65536]{0}', space=vmem, size = 0x10000, scoped, tag = 'input window, operand 3, single buffered']
    #allocation5 [shape = 's32[1]{0}', space=sflag, size = 0x4, scoped, tag = 'scoped memory for mlp_forward.1']
    %10 = vsyncpa [#allocation3], 0
    %11 = vsyncpa [#allocation5], 0
    // Predicated region
    $region2: #{mlp_forward.1} parent=1 // pred_check
      _
    $region3: #{mlp_forward.1} parent=1 // pred_check_branch
      %13 = sbr.rel (0) target = $region5
    $region4: #{mlp_forward.1} parent=1 // pred_region
      _
    $region5: #{mlp_forward.1} parent=1 // pred_fallthru
      _
    // Predicated region
    $region6: #{mlp_forward.1} parent=1 // pred_check
      _
    $region7: #{mlp_forward.1} parent=1 // pred_check_branch
      %15 = sbr.rel (0) target = $region9
    $region8: #{mlp_forward.1} parent=1 // pred_region
      %s17 = ssub.s32 1024, 1024
      %18 = vsyncadd [#allocation3], %s17
      %s19 = sshll.u32 [#allocation2], 4
      %s20 = int_to_ptr.vmem [resolvable:$true] %s19
      %25 = dma.hbm_to_vmem [thread:$0]  %s1, 1024, %s20, [#allocation3], 128, 128, 8
    $region9: #{mlp_forward.1} parent=1 // pred_fallthru
      _
    // Predicated region
    $region10: #{mlp_forward.1} parent=1 // pred_check
      _
    $region11: #{mlp_forward.1} parent=1 // pred_check_branch
      %27 = sbr.rel (0) target = $region13
    $region12: #{mlp_forward.1} parent=1 // pred_region
      _
    $region13: #{mlp_forward.1} parent=1 // pred_fallthru
      _
    // Predicated region
    $region14: #{mlp_forward.1} parent=1 // pred_check
      _
    $region15: #{mlp_forward.1} parent=1 // pred_check_branch
      %29 = sbr.rel (0) target = $region17
    $region16: #{mlp_forward.1} parent=1 // pred_region
      %s31 = ssub.s32 2048, 2048
      %32 = vsyncadd [#allocation5], %s31
      %s33 = sshll.u32 [#allocation4], 4
      %s34 = int_to_ptr.vmem [resolvable:$true] %s33
      %39 = dma.hbm_to_vmem [thread:$0]  %s3, 2048, %s34, [#allocation5], 64, 64, 4
    $region17: #{mlp_forward.1} parent=1 // pred_fallthru
      _
    // Predicated region
    $region18: #{mlp_forward.1} parent=1 // pred_check
      _
    $region19: #{mlp_forward.1} parent=1 // pred_check_branch
      %41 = sbr.rel (0) target = $region21
    $region20: #{mlp_forward.1} parent=1 // pred_region
      _
    $region21: #{mlp_forward.1} parent=1 // pred_fallthru
      _
    // Predicated region
    $region22: #{mlp_forward.1} parent=1 // pred_check
      _
    $region23: #{mlp_forward.1} parent=1 // pred_check_branch
      %43 = sbr.rel (0) target = $region25
    $region24: #{mlp_forward.1} parent=1 // pred_region
      %44 = dma.done [#allocation3], 1024
    $region25: #{mlp_forward.1} parent=1 // pred_fallthru
      _
    // Predicated region
    $region26: #{mlp_forward.1} parent=1 // pred_check
      _
    $region27: #{mlp_forward.1} parent=1 // pred_check_branch
      %46 = sbr.rel (0) target = $region29
    $region28: #{mlp_forward.1} parent=1 // pred_region
      %47 = dma.done [#allocation5], 2048
    $region29: #{mlp_forward.1} parent=1 // pred_fallthru
      _
    %v49 = vld [vmem:[%s0] sm:$0x1]
    %v50 = vpack.c.bf16 %v49, %v49
    %v51 = vld [vmem:[#allocation2] sm:$0xff]
    %v52 = vld [vmem:[#allocation2 + $0x8] sm:$0xff]
    %v53 = vld [vmem:[#allocation2 + $0x10] sm:$0xff]
    %v54 = vld [vmem:[#allocation2 + $0x18] sm:$0xff]
    %v55 = vld [vmem:[#allocation2 + $0x20] sm:$0xff]
    %v56 = vld [vmem:[#allocation2 + $0x28] sm:$0xff]
    %v57 = vld [vmem:[#allocation2 + $0x30] sm:$0xff]
    %v58 = vld [vmem:[#allocation2 + $0x38] sm:$0xff]
    %v59 = vld [vmem:[%s2] sm:$0x3]
    %v68 = vunpack.c.l.b16 %v51
    %v69 = vunpack.c.h.b16 %v51
    %v70 = vunpack.c.l.b16 %v52
    %v71 = vunpack.c.h.b16 %v52
    %v72 = vunpack.c.l.b16 %v53
    %v73 = vunpack.c.h.b16 %v53
    %v74 = vunpack.c.l.b16 %v54
    %v75 = vunpack.c.h.b16 %v54
    %v76 = vunpack.c.l.b16 %v55
    %v77 = vunpack.c.h.b16 %v55
    %v78 = vunpack.c.l.b16 %v56
    %v79 = vunpack.c.h.b16 %v56
    %v80 = vunpack.c.l.b16 %v57
    %v81 = vunpack.c.h.b16 %v57
    %v82 = vunpack.c.l.b16 %v58
    %v83 = vunpack.c.h.b16 %v58
    %v84 = vpack.c.b16 %v70, %v68
    %v85 = vpack.c.b16 %v71, %v69
    %v86 = vpack.c.b16 %v74, %v72
    %v87 = vpack.c.b16 %v75, %v73
    %v88 = vpack.c.b16 %v78, %v76
    %v89 = vpack.c.b16 %v79, %v77
    %v90 = vpack.c.b16 %v82, %v80
    %v91 = vpack.c.b16 %v83, %v81
    %v101 = vlaneseq
    %v102 = vshrl.u32 %v101, 7
    %v103 = vsub.s32 0, %v102
    %v104 = vrot.slane %v59, %v103
    %v105 = vlaneseq
    %v106 = vshrl.u32 %v105, 7
    %v107 = vsub.s32 1, %v106
    %v108 = vrot.slane %v59, %v107
    %vm111 = vcmask 523264
    %v113 = vsel %vm111, %v50, 0
    %115 = vmatprep.subr.bf16.mxu0 %v85
    %116 = vmatpush1.bf16.msra.mxu0 %v84
    %117 = vmatprep.subr.bf16.mxu0 %v87
    %118 = vmatpush1.bf16.msra.mxu0 %v86
    %119 = vmatprep.subr.bf16.mxu0 %v89
    %120 = vmatpush1.bf16.msra.mxu0 %v88
    %121 = vmatprep.subr.bf16.mxu0 %v91
    %122 = vmatpush1.bf16.msra.mxu0 %v90
    %123 = vmatprep.subr.bf16.mxu0 0
    %124 = vmatpush1.bf16.msra.mxu0 0
    %125 = vmatprep.subr.bf16.mxu0 0
    %126 = vmatpush1.bf16.msra.mxu0 0
    %127 = vmatprep.subr.bf16.mxu0 0
    %128 = vmatpush1.bf16.msra.mxu0 0
    %129 = vmatprep.subr.bf16.mxu0 0
    %130 = vmatpush1.bf16.msra.mxu0 0
    %131 = vmatprep.subr.bf16.mxu0 0
    %132 = vmatpush1.bf16.msra.mxu0 0
    %133 = vmatprep.subr.bf16.mxu0 0
    %134 = vmatpush1.bf16.msra.mxu0 0
    %135 = vmatprep.subr.bf16.mxu0 0
    %136 = vmatpush1.bf16.msra.mxu0 0
    %137 = vmatprep.subr.bf16.mxu0 0
    %138 = vmatpush1.bf16.msra.mxu0 0
    %139 = vmatprep.subr.bf16.mxu0 0
    %140 = vmatpush1.bf16.msra.mxu0 0
    %141 = vmatprep.subr.bf16.mxu0 0
    %142 = vmatpush1.bf16.msra.mxu0 0
    %143 = vmatprep.subr.bf16.mxu0 0
    %144 = vmatpush1.bf16.msra.mxu0 0
    %145 = vmatprep.subr.bf16.mxu0 0
    %146 = vmatpush1.bf16.msra.mxu0 0
    %147 = vmatprep.mubr.bf16.mxu0 0
    %148 = vmatmul.mubr.bf16.gmra.mrb[0].mxu0 %v113
    %v149 = vpop.f32.mrb[0].mxu0
    %v150 = vadd.f32 %v104, %v149
    %v151 = vpop.f32.mrb[0].mxu0
    %v152 = vadd.f32 %v108, %v151
    %v153 = vpop.f32.mrb[0].mxu0
    %v154 = vpop.f32.mrb[0].mxu0
    %155 = vdwg.mxu0
    %v156 = vmax.f32 %v150, 0.0
    %v157 = vmax.f32 %v152, 0.0
    %v158 = vpack.c.bf16 %v156, %v156
    %v159 = vpack.c.bf16 %v157, %v157
    %v160 = vld [vmem:[#allocation4] sm:$0xf]
    %v161 = vld [vmem:[#allocation4 + $0x4] sm:$0xf]
    %v162 = vld [vmem:[#allocation4 + $0x8] sm:$0xf]
    %v163 = vld [vmem:[#allocation4 + $0xc] sm:$0xf]
    %v164 = vld [vmem:[#allocation4 + $0x10] sm:$0xf]
    %v165 = vld [vmem:[#allocation4 + $0x14] sm:$0xf]
    %v166 = vld [vmem:[#allocation4 + $0x18] sm:$0xf]
    %v167 = vld [vmem:[#allocation4 + $0x1c] sm:$0xf]
    %v168 = vld [vmem:[#allocation4 + $0x20] sm:$0xf]
    %v169 = vld [vmem:[#allocation4 + $0x24] sm:$0xf]
    %v170 = vld [vmem:[#allocation4 + $0x28] sm:$0xf]
    %v171 = vld [vmem:[#allocation4 + $0x2c] sm:$0xf]
    %v172 = vld [vmem:[#allocation4 + $0x30] sm:$0xf]
    %v173 = vld [vmem:[#allocation4 + $0x34] sm:$0xf]
    %v174 = vld [vmem:[#allocation4 + $0x38] sm:$0xf]
    %v175 = vld [vmem:[#allocation4 + $0x3c] sm:$0xf]
    %v176 = vld [vmem:[#allocation4 + $0x40] sm:$0xf]
    %v177 = vld [vmem:[#allocation4 + $0x44] sm:$0xf]
    %v178 = vld [vmem:[#allocation4 + $0x48] sm:$0xf]
    %v179 = vld [vmem:[#allocation4 + $0x4c] sm:$0xf]
    %v180 = vld [vmem:[#allocation4 + $0x50] sm:$0xf]
    %v181 = vld [vmem:[#allocation4 + $0x54] sm:$0xf]
    %v182 = vld [vmem:[#allocation4 + $0x58] sm:$0xf]
    %v183 = vld [vmem:[#allocation4 + $0x5c] sm:$0xf]
    %v184 = vld [vmem:[#allocation4 + $0x60] sm:$0xf]
    %v185 = vld [vmem:[#allocation4 + $0x64] sm:$0xf]
    %v186 = vld [vmem:[#allocation4 + $0x68] sm:$0xf]
    %v187 = vld [vmem:[#allocation4 + $0x6c] sm:$0xf]
    %v188 = vld [vmem:[#allocation4 + $0x70] sm:$0xf]
    %v189 = vld [vmem:[#allocation4 + $0x74] sm:$0xf]
    %v190 = vld [vmem:[#allocation4 + $0x78] sm:$0xf]
    %v191 = vld [vmem:[#allocation4 + $0x7c] sm:$0xf]
    %v192 = vld [vmem:[%s4] sm:$0x1]
    %v225 = vunpack.c.l.b16 %v160
    %v226 = vunpack.c.l.b16 %v161
    %v227 = vunpack.c.l.b16 %v162
    %v228 = vunpack.c.l.b16 %v163
    %v229 = vunpack.c.l.b16 %v164
    %v230 = vunpack.c.l.b16 %v165
    %v231 = vunpack.c.l.b16 %v166
    %v232 = vunpack.c.l.b16 %v167
    %v233 = vunpack.c.l.b16 %v168
    %v234 = vunpack.c.l.b16 %v169
    %v235 = vunpack.c.l.b16 %v170
    %v236 = vunpack.c.l.b16 %v171
    %v237 = vunpack.c.l.b16 %v172
    %v238 = vunpack.c.l.b16 %v173
    %v239 = vunpack.c.l.b16 %v174
    %v240 = vunpack.c.l.b16 %v175
    %v241 = vunpack.c.l.b16 %v176
    %v242 = vunpack.c.l.b16 %v177
    %v243 = vunpack.c.l.b16 %v178
    %v244 = vunpack.c.l.b16 %v179
    %v245 = vunpack.c.l.b16 %v180
    %v246 = vunpack.c.l.b16 %v181
    %v247 = vunpack.c.l.b16 %v182
    %v248 = vunpack.c.l.b16 %v183
    %v249 = vunpack.c.l.b16 %v184
    %v250 = vunpack.c.l.b16 %v185
    %v251 = vunpack.c.l.b16 %v186
    %v252 = vunpack.c.l.b16 %v187
    %v253 = vunpack.c.l.b16 %v188
    %v254 = vunpack.c.l.b16 %v189
    %v255 = vunpack.c.l.b16 %v190
    %v256 = vunpack.c.l.b16 %v191
    %v257 = vpack.c.b16 %v226, %v225
    %v258 = vpack.c.b16 %v228, %v227
    %v259 = vpack.c.b16 %v230, %v229
    %v260 = vpack.c.b16 %v232, %v231
    %v261 = vpack.c.b16 %v234, %v233
    %v262 = vpack.c.b16 %v236, %v235
    %v263 = vpack.c.b16 %v238, %v237
    %v264 = vpack.c.b16 %v240, %v239
    %v265 = vpack.c.b16 %v242, %v241
    %v266 = vpack.c.b16 %v244, %v243
    %v267 = vpack.c.b16 %v246, %v245
    %v268 = vpack.c.b16 %v248, %v247
    %v269 = vpack.c.b16 %v250, %v249
    %v270 = vpack.c.b16 %v252, %v251
    %v271 = vpack.c.b16 %v254, %v253
    %v272 = vpack.c.b16 %v256, %v255
    %289 = vmatprep.subr.bf16.mxu0 0
    %290 = vmatpush1.bf16.msra.mxu0 %v257
    %291 = vmatprep.subr.bf16.mxu0 0
    %292 = vmatpush1.bf16.msra.mxu0 %v258
    %293 = vmatprep.subr.bf16.mxu0 0
    %294 = vmatpush1.bf16.msra.mxu0 %v259
    %295 = vmatprep.subr.bf16.mxu0 0
    %296 = vmatpush1.bf16.msra.mxu0 %v260
    %297 = vmatprep.subr.bf16.mxu0 0
    %298 = vmatpush1.bf16.msra.mxu0 %v261
    %299 = vmatprep.subr.bf16.mxu0 0
    %300 = vmatpush1.bf16.msra.mxu0 %v262
    %301 = vmatprep.subr.bf16.mxu0 0
    %302 = vmatpush1.bf16.msra.mxu0 %v263
    %303 = vmatprep.subr.bf16.mxu0 0
    %304 = vmatpush1.bf16.msra.mxu0 %v264
    %305 = vmatprep.subr.bf16.mxu0 0
    %306 = vmatpush1.bf16.msra.mxu0 %v265
    %307 = vmatprep.subr.bf16.mxu0 0
    %308 = vmatpush1.bf16.msra.mxu0 %v266
    %309 = vmatprep.subr.bf16.mxu0 0
    %310 = vmatpush1.bf16.msra.mxu0 %v267
    %311 = vmatprep.subr.bf16.mxu0 0
    %312 = vmatpush1.bf16.msra.mxu0 %v268
    %313 = vmatprep.subr.bf16.mxu0 0
    %314 = vmatpush1.bf16.msra.mxu0 %v269
    %315 = vmatprep.subr.bf16.mxu0 0
    %316 = vmatpush1.bf16.msra.mxu0 %v270
    %317 = vmatprep.subr.bf16.mxu0 0
    %318 = vmatpush1.bf16.msra.mxu0 %v271
    %319 = vmatprep.subr.bf16.mxu0 0
    %320 = vmatpush1.bf16.msra.mxu0 %v272
    %321 = vmatprep.mubr.bf16.mxu0 %v159
    %322 = vmatmul.mubr.bf16.gmra.mrb[0].mxu0 %v158
    %v323 = vpop.f32.mrb[0].mxu0
    %v324 = vadd.f32 %v192, %v323
    %v325 = vpop.f32.mrb[0].mxu0
    %v326 = vpop.f32.mrb[0].mxu0
    %v327 = vpop.f32.mrb[0].mxu0
    %328 = vdwg.mxu0
    %329 = vst [vmem:[%s5] sm:$0x1] %v324
    // Predicated region
    $region30: #{mlp_forward.1} parent=1 // pred_check
      _
    $region31: #{mlp_forward.1} parent=1 // pred_check_branch
      %331 = sbr.rel (0) target = $region33
    $region32: #{mlp_forward.1} parent=1 // pred_region
      _
    $region33: #{mlp_forward.1} parent=1 // pred_fallthru
      _
    // Predicated region
    $region34: #{mlp_forward.1} parent=1 // pred_check
      _
    $region35: #{mlp_forward.1} parent=1 // pred_check_branch
      %333 = sbr.rel (0) target = $region37
    $region36: #{mlp_forward.1} parent=1 // pred_region
      _
    $region37: #{mlp_forward.1} parent=1 // pred_fallthru
      _
    %334 = vsyncpa [#allocation3], 1
    %335 = vsyncpa [#allocation5], 1

</llo_original>
